<compile_context>
chip_gen: v7x
topology: tpu7x:2x2x1
jax: 0.10.0
libtpu: 0.0.40
codegen_flags: <defaults>
</compile_context>

<pallas_src>
import functools

import jax
import jax.numpy as jnp
from jax.experimental import pallas as pl
from jax.experimental.pallas import tpu as pltpu

EPS_PONO = 1e-5
EPS_BN = 1e-5


def _detect_vmem_limit_bytes():
    # 75% of physical VMEM, clamped to [32 MiB, 96 MiB]; safe fallback 32 MiB.
    try:
        cap = int(pltpu.get_tpu_info().vmem_capacity_bytes)
        return max(32 * 1024 * 1024, min(96 * 1024 * 1024, (cap * 3) // 4))
    except Exception:
        return 32 * 1024 * 1024


_VMEM_LIMIT = _detect_vmem_limit_bytes()


def _choose_tile_s(s, k_dim, cout):
    """Lane-tile size over the flattened Ho*Wo spatial positions of one image."""
    if s <= 512:
        return s  # single full-dim tile per image (also covers s < 128)
    # Keep the double-buffered per-step VMEM footprint around <= 12 MiB.
    bytes_per_col = 2 * (2 * k_dim + 2 * cout + 2 * 4)
    cap = (12 * 1024 * 1024) // max(bytes_per_col, 1)
    cap = max(128, min(4096, (cap // 128) * 128))
    if s % 128 == 0:
        best, cand = 128, 128
        limit = min(s // 2, cap)  # >= 2 tiles/image: pipelining + v7x megacore
        while cand <= limit:
            if s % cand == 0:
                best = cand
            cand += 128
        return best
    return min(1024, cap)  # ragged spatial extent: pad + mask


# ---------------------------------------------------------------------------
# Pass 1: conv (single MXU matmul) + bias + PONO + BN partial stats.
# ---------------------------------------------------------------------------
def _conv_pono_kernel(p_ref, w_ref, b_ref,
                      yn_ref, mean_ref, std_ref, psum_ref, psq_ref,
                      *, cout, tile_s, s_real, needs_mask):
    # conv: (Cout, 9Cin) @ (9Cin, TILE_S), bf16 in, f32 accumulate on the MXU.
    y = jnp.dot(w_ref[...], p_ref[...], preferred_element_type=jnp.float32)
    y = y + b_ref[...]                                    # (Cout, 1) bias bcast

    # PONO (affine=False): per-position stats over channels (sublane reduction).
    mu = jnp.sum(y, axis=0, keepdims=True) * (1.0 / cout)            # (1, TILE_S)
    d = y - mu
    var = jnp.sum(d * d, axis=0, keepdims=True) * (1.0 / max(cout - 1, 1))
    inv_std = jax.lax.rsqrt(var + EPS_PONO)               # EUP rsqrt, no divide
    yn = d * inv_std

    mean_ref[...] = mu
    std_ref[...] = jnp.sqrt(var + EPS_PONO)
    yn_ref[...] = yn.astype(yn_ref.dtype)                 # bf16 store halves HBM

    # BatchNorm batch statistics: per-channel partial sums over this tile's
    # valid lanes (lane reduction); wrapper does the tiny cross-tile reduction
    # so the grid stays fully "parallel" (both TensorCores busy on v7x).
    if needs_mask:                                        # only if S was padded
        lane = jax.lax.broadcasted_iota(jnp.int32, (1, tile_s), 1)
        valid = (lane < (s_real - pl.program_id(1) * tile_s)).astype(jnp.float32)
        ym = yn * valid
    else:
        ym = yn
    psum_ref[...] = jnp.sum(ym, axis=1, keepdims=True)               # (Cout, 1)
    psq_ref[...] = jnp.sum(ym * ym, axis=1, keepdims=True)


# ---------------------------------------------------------------------------
# Pass 2: fused BatchNorm-apply + MS + ReLU (per-channel scale/shift pre-folded).
# ---------------------------------------------------------------------------
def _bn_ms_relu_kernel(y_ref, scale_ref, shift_ref, o_ref):
    y = y_ref[...].astype(jnp.float32)
    o_ref[...] = jnp.maximum(y * scale_ref[...] + shift_ref[...], 0.0)


@jax.jit
def conv2d_block(x_nchw, conv_w, conv_b, bn_gamma, bn_beta, ms_gamma, ms_beta):
    """Conv2dBlock(conv 3x3/s2/p1 + PONO + BN(train) + MS + ReLU) forward.

    Returns (out (N,Cout,Ho,Wo), mean (N,1,Ho,Wo), std (N,1,Ho,Wo))."""
    n, cin, h, w = x_nchw.shape
    cout = conv_w.shape[0]
    ho = (h + 2 - 3) // 2 + 1
    wo = (w + 2 - 3) // 2 + 1
    s = ho * wo
    kdim = 9 * cin

    # --- im2col built directly from NCHW (K = (kh,kw,ci) on sublanes, spatial on
    # lanes), cast to bf16; no NCHW->NHWC transpose pass any more. ---
    # TODO(synk): fuse this patch extraction into Pass 1 (manual DMA of
    # overlapping input row strips / 4-phase views) to remove the remaining
    # ~2.25x bf16 patch materialization from HBM.
    xp = jnp.pad(x_nchw.astype(jnp.bfloat16), ((0, 0), (0, 0), (1, 1), (1, 1)))
    taps = [xp[:, :, kh:kh + 2 * ho:2, kw:kw + 2 * wo:2]
            for kh in range(3) for kw in range(3)]
    patches = jnp.stack(taps, axis=1).reshape(n, kdim, s)            # (N, 9Cin, S)

    tile_s = _choose_tile_s(s, kdim, cout)
    nt = pl.cdiv(s, tile_s)
    s_pad = nt * tile_s
    needs_mask = s_pad != s
    if needs_mask:
        patches = jnp.pad(patches, ((0, 0), (0, 0), (0, s_pad - s)))

    # (Cout, Cin, 3, 3) -> (Cout, 9*Cin) with K ordered (kh, kw, ci) like taps.
    w_mat = jnp.transpose(conv_w, (0, 2, 3, 1)).reshape(cout, kdim)
    w_mat = w_mat.astype(jnp.bfloat16)
    b_col = conv_b.astype(jnp.float32).reshape(cout, 1)

    kernel1 = functools.partial(_conv_pono_kernel, cout=cout, tile_s=tile_s,
                                s_real=s, needs_mask=needs_mask)
    cost1 = pl.CostEstimate(
        flops=2 * n * s_pad * kdim * cout + 10 * n * s_pad * cout,
        transcendentals=2 * n * s_pad,
        bytes_accessed=(patches.size * 2 + w_mat.size * 2
                        + n * cout * s_pad * 2 + 2 * n * s_pad * 4
                        + 2 * n * nt * cout * 4))

    yn, mean_f, std_f, psum, psq = pl.pallas_call(
        kernel1,
        grid=(n, nt),
        in_specs=[
            pl.BlockSpec((None, kdim, tile_s), lambda i, j: (i, 0, j)),   # patches
            pl.BlockSpec((cout, kdim), lambda i, j: (0, 0)),   # weights, resident
            pl.BlockSpec((cout, 1), lambda i, j: (0, 0)),      # bias, resident
        ],
        out_specs=(
            pl.BlockSpec((None, cout, tile_s), lambda i, j: (i, 0, j)),   # yn bf16
            pl.BlockSpec((None, 1, tile_s), lambda i, j: (i, 0, j)),      # PONO mu
            pl.BlockSpec((None, 1, tile_s), lambda i, j: (i, 0, j)),      # PONO std
            pl.BlockSpec((None, None, cout, 1), lambda i, j: (i, j, 0, 0)),
            pl.BlockSpec((None, None, cout, 1), lambda i, j: (i, j, 0, 0)),
        ),
        out_shape=(
            jax.ShapeDtypeStruct((n, cout, s_pad), jnp.bfloat16),
            jax.ShapeDtypeStruct((n, 1, s_pad), jnp.float32),
            jax.ShapeDtypeStruct((n, 1, s_pad), jnp.float32),
            jax.ShapeDtypeStruct((n, nt, cout, 1), jnp.float32),
            jax.ShapeDtypeStruct((n, nt, cout, 1), jnp.float32),
        ),
        compiler_params=pltpu.CompilerParams(
            dimension_semantics=("parallel", "parallel"),
            vmem_limit_bytes=_VMEM_LIMIT),
        cost_estimate=cost1,
    )(patches, w_mat, b_col)

    # --- global BatchNorm batch stats (tiny reduction) + fold BN affine & MS ---
    count = float(n * s)
    sum_c = jnp.sum(psum[..., 0], axis=(0, 1))                        # (Cout,)
    sumsq_c = jnp.sum(psq[..., 0], axis=(0, 1))
    bn_mean = sum_c / count
    bn_var = jnp.maximum(sumsq_c / count - bn_mean * bn_mean, 0.0)    # biased var
    inv = jax.lax.rsqrt(bn_var + EPS_BN)
    # TODO(synk): running_mean/running_var buffer updates are stateful training
    # bookkeeping with no effect on the forward output; not reproduced.
    g = bn_gamma.astype(jnp.float32)
    mg = ms_gamma.astype(jnp.float32)
    scale = (g * mg * inv).reshape(cout, 1)
    shift = ((bn_beta.astype(jnp.float32) - g * bn_mean * inv) * mg
             + ms_beta.astype(jnp.float32)).reshape(cout, 1)

    out_flat = pl.pallas_call(
        _bn_ms_relu_kernel,
        grid=(n, nt),
        in_specs=[
            pl.BlockSpec((None, cout, tile_s), lambda i, j: (i, 0, j)),
            pl.BlockSpec((cout, 1), lambda i, j: (0, 0)),      # scale, resident
            pl.BlockSpec((cout, 1), lambda i, j: (0, 0)),      # shift, resident
        ],
        out_specs=pl.BlockSpec((None, cout, tile_s), lambda i, j: (i, 0, j)),
        out_shape=jax.ShapeDtypeStruct((n, cout, s_pad), jnp.float32),
        compiler_params=pltpu.CompilerParams(
            dimension_semantics=("parallel", "parallel"),
            vmem_limit_bytes=_VMEM_LIMIT),
    )(yn, scale, shift)

    if needs_mask:
        out_flat = out_flat[:, :, :s]
        mean_f = mean_f[:, :, :s]
        std_f = std_f[:, :, :s]
    out = out_flat.reshape(n, cout, ho, wo)        # already NCHW: reshape only
    mean = mean_f.reshape(n, 1, ho, wo)
    std = std_f.reshape(n, 1, ho, wo)
    return out, mean, std


if __name__ == "__main__":
    key = jax.random.PRNGKey(0)
    k_x, k_w, k_b, k_g, k_be = jax.random.split(key, 5)

    N, Cin, H, W = 2, 4, 16, 16
    Cout = 8

    x = jax.random.normal(k_x, (N, Cin, H, W), dtype=jnp.float32)
    conv_w = jax.random.normal(k_w, (Cout, Cin, 3, 3), dtype=jnp.float32) * 0.1
    conv_b = jax.random.normal(k_b, (Cout,), dtype=jnp.float32) * 0.1

    # BatchNorm2d default init: weight = 1, bias = 0
    bn_gamma = jnp.ones((Cout,), dtype=jnp.float32)
    bn_beta = jnp.zeros((Cout,), dtype=jnp.float32)

    # MS gamma/beta passed into forward (per-channel, broadcast over N, H, W)
    ms_gamma = 1.0 + 0.1 * jax.random.normal(k_g, (Cout,), dtype=jnp.float32)
    ms_beta = 0.1 * jax.random.normal(k_be, (Cout,), dtype=jnp.float32)

    out, mean, std = conv2d_block(x, conv_w, conv_b, bn_gamma, bn_beta,
                                  ms_gamma, ms_beta)
    jax.block_until_ready((out, mean, std))

    assert out.shape == (N, Cout, H // 2, W // 2)
    assert mean.shape == (N, 1, H // 2, W // 2)
    assert std.shape == (N, 1, H // 2, W // 2)
    assert bool(jnp.all(jnp.isfinite(out)))
    assert bool(jnp.all(out >= 0.0))  # ReLU
    print("KERNEL_OK")
</pallas_src>

<mosaic_0001>
module attributes {stable_mosaic.version = 11 : i64} {
  func.func @_conv_pono_kernel(%arg0: i32, %arg1: i32, %arg2: memref<1x36x64xbf16, #tpu.memory_space<vmem>>, %arg3: memref<8x36xbf16, #tpu.memory_space<vmem>>, %arg4: memref<8x1xf32, #tpu.memory_space<vmem>>, %arg5: memref<1x8x64xbf16, #tpu.memory_space<vmem>>, %arg6: memref<1x1x64xf32, #tpu.memory_space<vmem>>, %arg7: memref<1x1x64xf32, #tpu.memory_space<vmem>>, %arg8: memref<1x1x8x1xf32, #tpu.memory_space<vmem>>, %arg9: memref<1x1x8x1xf32, #tpu.memory_space<vmem>>) attributes {dimension_semantics = [#tpu.dimension_semantics<parallel>, #tpu.dimension_semantics<parallel>], iteration_bounds = array<i64: 2, 1>, scalar_prefetch = 0 : i64, scratch_operands = 0 : i64, tpu.core_type = #tpu.core_type<tc>, window_params = [{transform_indices = @transform_0, window_bounds = array<i64: 1, 36, 64>}, {pipeline_mode = #tpu.pipeline_mode<synchronous>, transform_indices = @transform_1, window_bounds = array<i64: 8, 36>}, {pipeline_mode = #tpu.pipeline_mode<synchronous>, transform_indices = @transform_2, window_bounds = array<i64: 8, 1>}, {transform_indices = @transform_3, window_bounds = array<i64: 1, 8, 64>}, {transform_indices = @transform_4, window_bounds = array<i64: 1, 1, 64>}, {transform_indices = @transform_5, window_bounds = array<i64: 1, 1, 64>}, {transform_indices = @transform_6, window_bounds = array<i64: 1, 1, 8, 1>}, {transform_indices = @transform_7, window_bounds = array<i64: 1, 1, 8, 1>}]} {
    %c0 = arith.constant 0 : index
    %c0_0 = arith.constant 0 : index
    %0 = vector.load %arg3[%c0, %c0_0] : memref<8x36xbf16, #tpu.memory_space<vmem>>, vector<8x36xbf16>
    %c0_1 = arith.constant 0 : index
    %c0_2 = arith.constant 0 : index
    %c0_3 = arith.constant 0 : index
    %1 = vector.load %arg2[%c0_1, %c0_2, %c0_3] : memref<1x36x64xbf16, #tpu.memory_space<vmem>>, vector<1x36x64xbf16>
    %2 = vector.shape_cast %1 : vector<1x36x64xbf16> to vector<36x64xbf16>
    %cst = arith.constant dense<0.000000e+00> : vector<8x64xf32>
    %3 = tpu.matmul %0, %2, %cst {dimension_numbers = #tpu.dot_dimension_numbers<[1], [0], [0], [1], [0, 0, 1, 1], [], []>} : vector<8x36xbf16>, vector<36x64xbf16>, vector<8x64xf32> -> vector<8x64xf32>
    %c0_4 = arith.constant 0 : index
    %c0_5 = arith.constant 0 : index
    %4 = vector.load %arg4[%c0_4, %c0_5] : memref<8x1xf32, #tpu.memory_space<vmem>>, vector<8x1xf32>
    %5 = vector.broadcast %4 : vector<8x1xf32> to vector<8x64xf32>
    %6 = arith.addf %3, %5 : vector<8x64xf32>
    %cst_6 = arith.constant dense<0.000000e+00> : vector<64xf32>
    %7 = vector.multi_reduction <add>, %6, %cst_6 [0] : vector<8x64xf32> to vector<64xf32>
    %8 = vector.shape_cast %7 : vector<64xf32> to vector<1x64xf32>
    %cst_7 = arith.constant 1.250000e-01 : f32
    %9 = vector.broadcast %cst_7 : f32 to vector<1x64xf32>
    %10 = arith.mulf %8, %9 : vector<1x64xf32>
    %11 = vector.broadcast %10 : vector<1x64xf32> to vector<8x64xf32>
    %12 = arith.subf %6, %11 : vector<8x64xf32>
    %13 = arith.mulf %12, %12 : vector<8x64xf32>
    %cst_8 = arith.constant dense<0.000000e+00> : vector<64xf32>
    %14 = vector.multi_reduction <add>, %13, %cst_8 [0] : vector<8x64xf32> to vector<64xf32>
    %15 = vector.shape_cast %14 : vector<64xf32> to vector<1x64xf32>
    %cst_9 = arith.constant 0.142857149 : f32
    %16 = vector.broadcast %cst_9 : f32 to vector<1x64xf32>
    %17 = arith.mulf %15, %16 : vector<1x64xf32>
    %cst_10 = arith.constant 9.99999974E-6 : f32
    %18 = vector.broadcast %cst_10 : f32 to vector<1x64xf32>
    %19 = arith.addf %17, %18 : vector<1x64xf32>
    %20 = math.rsqrt %19 : vector<1x64xf32>
    %21 = vector.broadcast %20 : vector<1x64xf32> to vector<8x64xf32>
    %22 = arith.mulf %12, %21 : vector<8x64xf32>
    %c0_11 = arith.constant 0 : index
    %c0_12 = arith.constant 0 : index
    %c0_13 = arith.constant 0 : index
    %23 = vector.load %arg6[%c0_11, %c0_12, %c0_13] : memref<1x1x64xf32, #tpu.memory_space<vmem>>, vector<1x1x64xf32>
    %24 = vector.shape_cast %23 : vector<1x1x64xf32> to vector<1x64xf32>
    %25 = vector.shape_cast %10 : vector<1x64xf32> to vector<1x1x64xf32>
    tpu.vector_store %arg6[%c0_11, %c0_12, %c0_13], %25 {strides = array<i32>} : memref<1x1x64xf32, #tpu.memory_space<vmem>>, vector<1x1x64xf32>,
    %cst_14 = arith.constant 9.99999974E-6 : f32
    %26 = vector.broadcast %cst_14 : f32 to vector<1x64xf32>
    %27 = arith.addf %17, %26 : vector<1x64xf32>
    %28 = math.sqrt %27 : vector<1x64xf32>
    %c0_15 = arith.constant 0 : index
    %c0_16 = arith.constant 0 : index
    %c0_17 = arith.constant 0 : index
    %29 = vector.load %arg7[%c0_15, %c0_16, %c0_17] : memref<1x1x64xf32, #tpu.memory_space<vmem>>, vector<1x1x64xf32>
    %30 = vector.shape_cast %29 : vector<1x1x64xf32> to vector<1x64xf32>
    %31 = vector.shape_cast %28 : vector<1x64xf32> to vector<1x1x64xf32>
    tpu.vector_store %arg7[%c0_15, %c0_16, %c0_17], %31 {strides = array<i32>} : memref<1x1x64xf32, #tpu.memory_space<vmem>>, vector<1x1x64xf32>,
    %32 = arith.truncf %22 : vector<8x64xf32> to vector<8x64xbf16>
    %c0_18 = arith.constant 0 : index
    %c0_19 = arith.constant 0 : index
    %c0_20 = arith.constant 0 : index
    %33 = vector.load %arg5[%c0_18, %c0_19, %c0_20] : memref<1x8x64xbf16, #tpu.memory_space<vmem>>, vector<1x8x64xbf16>
    %34 = vector.shape_cast %33 : vector<1x8x64xbf16> to vector<8x64xbf16>
    %35 = vector.shape_cast %32 : vector<8x64xbf16> to vector<1x8x64xbf16>
    tpu.vector_store %arg5[%c0_18, %c0_19, %c0_20], %35 {strides = array<i32>} : memref<1x8x64xbf16, #tpu.memory_space<vmem>>, vector<1x8x64xbf16>,
    %cst_21 = arith.constant dense<0.000000e+00> : vector<8xf32>
    %36 = vector.multi_reduction <add>, %22, %cst_21 [1] : vector<8x64xf32> to vector<8xf32>
    %37 = vector.shape_cast %36 : vector<8xf32> to vector<8x1xf32>
    %c0_22 = arith.constant 0 : index
    %c0_23 = arith.constant 0 : index
    %c0_24 = arith.constant 0 : index
    %c0_25 = arith.constant 0 : index
    %38 = vector.load %arg8[%c0_22, %c0_23, %c0_24, %c0_25] : memref<1x1x8x1xf32, #tpu.memory_space<vmem>>, vector<1x1x8x1xf32>
    %39 = vector.shape_cast %38 : vector<1x1x8x1xf32> to vector<8x1xf32>
    %40 = vector.shape_cast %37 : vector<8x1xf32> to vector<1x1x8x1xf32>
    tpu.vector_store %arg8[%c0_22, %c0_23, %c0_24, %c0_25], %40 {strides = array<i32>} : memref<1x1x8x1xf32, #tpu.memory_space<vmem>>, vector<1x1x8x1xf32>,
    %41 = arith.mulf %22, %22 : vector<8x64xf32>
    %cst_26 = arith.constant dense<0.000000e+00> : vector<8xf32>
    %42 = vector.multi_reduction <add>, %41, %cst_26 [1] : vector<8x64xf32> to vector<8xf32>
    %43 = vector.shape_cast %42 : vector<8xf32> to vector<8x1xf32>
    %c0_27 = arith.constant 0 : index
    %c0_28 = arith.constant 0 : index
    %c0_29 = arith.constant 0 : index
    %c0_30 = arith.constant 0 : index
    %44 = vector.load %arg9[%c0_27, %c0_28, %c0_29, %c0_30] : memref<1x1x8x1xf32, #tpu.memory_space<vmem>>, vector<1x1x8x1xf32>
    %45 = vector.shape_cast %44 : vector<1x1x8x1xf32> to vector<8x1xf32>
    %46 = vector.shape_cast %43 : vector<8x1xf32> to vector<1x1x8x1xf32>
    tpu.vector_store %arg9[%c0_27, %c0_28, %c0_29, %c0_30], %46 {strides = array<i32>} : memref<1x1x8x1xf32, #tpu.memory_space<vmem>>, vector<1x1x8x1xf32>,
    return
  }
  func.func @transform_0(%arg0: i32, %arg1: i32) -> (i32, i32, i32) {
    %c0_i32 = arith.constant 0 : i32
    %c0_i32_0 = arith.constant 0 : i32
    return %arg0, %c0_i32, %arg1 : i32, i32, i32
  }
  func.func @transform_1(%arg0: i32, %arg1: i32) -> (i32, i32) {
    %c0_i32 = arith.constant 0 : i32
    %c0_i32_0 = arith.constant 0 : i32
    %c0_i32_1 = arith.constant 0 : i32
    return %c0_i32, %c0_i32_0 : i32, i32
  }
  func.func @transform_2(%arg0: i32, %arg1: i32) -> (i32, i32) {
    %c0_i32 = arith.constant 0 : i32
    %c0_i32_0 = arith.constant 0 : i32
    %c0_i32_1 = arith.constant 0 : i32
    return %c0_i32, %c0_i32_0 : i32, i32
  }
  func.func @transform_3(%arg0: i32, %arg1: i32) -> (i32, i32, i32) {
    %c0_i32 = arith.constant 0 : i32
    %c0_i32_0 = arith.constant 0 : i32
    return %arg0, %c0_i32, %arg1 : i32, i32, i32
  }
  func.func @transform_4(%arg0: i32, %arg1: i32) -> (i32, i32, i32) {
    %c0_i32 = arith.constant 0 : i32
    %c0_i32_0 = arith.constant 0 : i32
    return %arg0, %c0_i32, %arg1 : i32, i32, i32
  }
  func.func @transform_5(%arg0: i32, %arg1: i32) -> (i32, i32, i32) {
    %c0_i32 = arith.constant 0 : i32
    %c0_i32_0 = arith.constant 0 : i32
    return %arg0, %c0_i32, %arg1 : i32, i32, i32
  }
  func.func @transform_6(%arg0: i32, %arg1: i32) -> (i32, i32, i32, i32) {
    %c0_i32 = arith.constant 0 : i32
    %c0_i32_0 = arith.constant 0 : i32
    %c0_i32_1 = arith.constant 0 : i32
    return %arg0, %arg1, %c0_i32, %c0_i32_0 : i32, i32, i32, i32
  }
  func.func @transform_7(%arg0: i32, %arg1: i32) -> (i32, i32, i32, i32) {
    %c0_i32 = arith.constant 0 : i32
    %c0_i32_0 = arith.constant 0 : i32
    %c0_i32_1 = arith.constant 0 : i32
    return %arg0, %arg1, %c0_i32, %c0_i32_0 : i32, i32, i32, i32
  }
}

module attributes {stable_mosaic.version = 11 : i64} {
  func.func @_bn_ms_relu_kernel(%arg0: i32, %arg1: i32, %arg2: memref<1x8x64xbf16, #tpu.memory_space<vmem>>, %arg3: memref<8x1xf32, #tpu.memory_space<vmem>>, %arg4: memref<8x1xf32, #tpu.memory_space<vmem>>, %arg5: memref<1x8x64xf32, #tpu.memory_space<vmem>>) attributes {dimension_semantics = [#tpu.dimension_semantics<parallel>, #tpu.dimension_semantics<parallel>], iteration_bounds = array<i64: 2, 1>, scalar_prefetch = 0 : i64, scratch_operands = 0 : i64, tpu.core_type = #tpu.core_type<tc>, window_params = [{transform_indices = @transform_0, window_bounds = array<i64: 1, 8, 64>}, {pipeline_mode = #tpu.pipeline_mode<synchronous>, transform_indices = @transform_1, window_bounds = array<i64: 8, 1>}, {pipeline_mode = #tpu.pipeline_mode<synchronous>, transform_indices = @transform_2, window_bounds = array<i64: 8, 1>}, {transform_indices = @transform_3, window_bounds = array<i64: 1, 8, 64>}]} {
    %c0 = arith.constant 0 : index
    %c0_0 = arith.constant 0 : index
    %c0_1 = arith.constant 0 : index
    %0 = vector.load %arg2[%c0, %c0_0, %c0_1] : memref<1x8x64xbf16, #tpu.memory_space<vmem>>, vector<1x8x64xbf16>
    %1 = vector.shape_cast %0 : vector<1x8x64xbf16> to vector<8x64xbf16>
    %2 = arith.extf %1 : vector<8x64xbf16> to vector<8x64xf32>
    %c0_2 = arith.constant 0 : index
    %c0_3 = arith.constant 0 : index
    %3 = vector.load %arg3[%c0_2, %c0_3] : memref<8x1xf32, #tpu.memory_space<vmem>>, vector<8x1xf32>
    %4 = vector.broadcast %3 : vector<8x1xf32> to vector<8x64xf32>
    %5 = arith.mulf %2, %4 : vector<8x64xf32>
    %c0_4 = arith.constant 0 : index
    %c0_5 = arith.constant 0 : index
    %6 = vector.load %arg4[%c0_4, %c0_5] : memref<8x1xf32, #tpu.memory_space<vmem>>, vector<8x1xf32>
    %7 = vector.broadcast %6 : vector<8x1xf32> to vector<8x64xf32>
    %8 = arith.addf %5, %7 : vector<8x64xf32>
    %cst = arith.constant 0.000000e+00 : f32
    %9 = vector.broadcast %cst : f32 to vector<8x64xf32>
    %10 = arith.maximumf %8, %9 : vector<8x64xf32>
    %c0_6 = arith.constant 0 : index
    %c0_7 = arith.constant 0 : index
    %c0_8 = arith.constant 0 : index
    %11 = vector.load %arg5[%c0_6, %c0_7, %c0_8] : memref<1x8x64xf32, #tpu.memory_space<vmem>>, vector<1x8x64xf32>
    %12 = vector.shape_cast %11 : vector<1x8x64xf32> to vector<8x64xf32>
    %13 = vector.shape_cast %10 : vector<8x64xf32> to vector<1x8x64xf32>
    tpu.vector_store %arg5[%c0_6, %c0_7, %c0_8], %13 {strides = array<i32>} : memref<1x8x64xf32, #tpu.memory_space<vmem>>, vector<1x8x64xf32>,
    return
  }
  func.func @transform_0(%arg0: i32, %arg1: i32) -> (i32, i32, i32) {
    %c0_i32 = arith.constant 0 : i32
    %c0_i32_0 = arith.constant 0 : i32
    return %arg0, %c0_i32, %arg1 : i32, i32, i32
  }
  func.func @transform_1(%arg0: i32, %arg1: i32) -> (i32, i32) {
    %c0_i32 = arith.constant 0 : i32
    %c0_i32_0 = arith.constant 0 : i32
    %c0_i32_1 = arith.constant 0 : i32
    return %c0_i32, %c0_i32_0 : i32, i32
  }
  func.func @transform_2(%arg0: i32, %arg1: i32) -> (i32, i32) {
    %c0_i32 = arith.constant 0 : i32
    %c0_i32_0 = arith.constant 0 : i32
    %c0_i32_1 = arith.constant 0 : i32
    return %c0_i32, %c0_i32_0 : i32, i32
  }
  func.func @transform_3(%arg0: i32, %arg1: i32) -> (i32, i32, i32) {
    %c0_i32 = arith.constant 0 : i32
    %c0_i32_0 = arith.constant 0 : i32
    return %arg0, %c0_i32, %arg1 : i32, i32, i32
  }
}

</mosaic_0001>

<llo_original>
// kernel: conv2d_block.3
$region0: #{conv2d_block.3}
  #allocation0 [shape = 'u32[]', space=smem, size = 0x4, offset = 0x4, fixed_abs, tag = 'smem constant byte address 0x4 - core index']
  #allocation1 [shape = 'u32[144,128]{1,0:T(1,128)}', space=vmem, size = 0x12000, scoped, tag = 'internal scratch']
  %s0 = inlined_call_operand.vmem [shape: bf16[2,8,64], index: 0, kind: input, shape index: {}]
  %s1 = inlined_call_operand.vmem [shape: f32[8,1], index: 1, kind: input, shape index: {}]
  %s2 = inlined_call_operand.vmem [shape: f32[8,1], index: 2, kind: input, shape index: {}]
  %s3 = inlined_call_operand.vmem [shape: f32[2,8,64], index: 3, kind: output, shape index: {}]
  %s4 = sld [smem:[#allocation0]]
  $region45: #{conv2d_block.3} parent=0
    _
  %s6 = ssub.s32 1, %s4
  %s7 = scalar_select 0, %s6, %s4
  loop: start=0, step=1, limit=4
  $region2: #{conv2d_block.3} parent=0 // loop_pre_header
    _
  $region3: #{conv2d_block.3} parent=0 // loop_header
    %s9 = sphi 0, %s13
    %p10 = scmp.ge.s32.totalorder %s9, 4
    %s16 = sphi 0, %s28
    %s17 = sphi 0, %s24
    %s18 = sphi 0, %s16
    %s19 = sphi 0, %s17
    %s20 = sphi 0, %s18
    %s21 = sphi 0, %s19
    %s33 = sphi 0, %s35
    %s36 = sphi 0, %s33
    %s37 = sphi 0, %s36
    %s53 = sphi 0, %s37
    %s57 = sphi 0, %s57
    %s59 = sphi 0, %s57
    %s60 = sphi 0, %s59
    %s74 = sphi 0, %s60
    %s78 = sphi 0, %s78
    %s80 = sphi 0, %s78
    %s81 = sphi 0, %s80
    %s95 = sphi 0, %s81
    %s103 = sphi 0, %s105
    %s106 = sphi 0, %s103
    %s107 = sphi 0, %s106
    %s123 = sphi 0, %s107
  $region4: #{conv2d_block.3} parent=0 // loop_header_branch
    %12 = sbr.rel (%p10) target = $region8
  $region5: #{conv2d_block.3} parent=0 // loop_body
    %s14 = ssub.s32 %s9, 1
    %s15 = ssub.s32 %s9, 2
    %s22 = sadd.s32 1, %s17
    %p23 = scmp.ge.s32.totalorder %s22, 1
    %s24 = scalar_select %p23, 0, %s22
    %s25 = sadd.s32 1, %s16
    %s26 = scalar_select %p23, %s25, %s16
    %p27 = scmp.ge.s32.totalorder %s26, 2
    %s28 = scalar_select %p27, 0, %s26
    %s29 = ssub.s32 %s16, %s28
    %s30 = ssub.s32 %s17, %s24
    %s31 = sor.u32 %s29, %s30
    %p32 = scmp.eq.s32.totalorder %s31, 0
    %s34 = sadd.s32 %s33, 1
    %s35 = scalar_select %p32, %s33, %s34
    %p38 = pneg %p32
    %p39 = scmp.eq.s32.totalorder %s9, 1
    %p40 = por %p38, %p39
    %p41 = scmp.ne.s32.totalorder %s33, %s36
    %p42 = scmp.eq.s32.totalorder %s9, 0
    %p43 = por %p41, %p42
    %p44 = scmp.ne.s32.totalorder %s33, %s36
    %p45 = scmp.eq.s32.totalorder %s14, 1
    %p46 = por %p44, %p45
    %p47 = scmp.ne.s32.totalorder %s36, %s37
    %p48 = scmp.eq.s32.totalorder %s14, 0
    %p49 = por %p47, %p48
    %p50 = scmp.ne.s32.totalorder %s36, %s37
    %p51 = scmp.eq.s32.totalorder %s15, 1
    %p52 = por %p50, %p51
    %p54 = scmp.ne.s32.totalorder %s37, %s53
    %p55 = scmp.eq.s32.totalorder %s15, 0
    %p56 = por %p54, %p55
    %s58 = sadd.s32 %s57, 1
    %p61 = scmp.eq.s32.totalorder %s9, 1
    %p62 = scmp.ne.s32.totalorder %s57, %s59
    %p63 = scmp.eq.s32.totalorder %s9, 0
    %p64 = por %p62, %p63
    %p65 = scmp.ne.s32.totalorder %s57, %s59
    %p66 = scmp.eq.s32.totalorder %s14, 1
    %p67 = por %p65, %p66
    %p68 = scmp.ne.s32.totalorder %s59, %s60
    %p69 = scmp.eq.s32.totalorder %s14, 0
    %p70 = por %p68, %p69
    %p71 = scmp.ne.s32.totalorder %s59, %s60
    %p72 = scmp.eq.s32.totalorder %s15, 1
    %p73 = por %p71, %p72
    %p75 = scmp.ne.s32.totalorder %s60, %s74
    %p76 = scmp.eq.s32.totalorder %s15, 0
    %p77 = por %p75, %p76
    %s79 = sadd.s32 %s78, 1
    %p82 = scmp.eq.s32.totalorder %s9, 1
    %p83 = scmp.ne.s32.totalorder %s78, %s80
    %p84 = scmp.eq.s32.totalorder %s9, 0
    %p85 = por %p83, %p84
    %p86 = scmp.ne.s32.totalorder %s78, %s80
    %p87 = scmp.eq.s32.totalorder %s14, 1
    %p88 = por %p86, %p87
    %p89 = scmp.ne.s32.totalorder %s80, %s81
    %p90 = scmp.eq.s32.totalorder %s14, 0
    %p91 = por %p89, %p90
    %p92 = scmp.ne.s32.totalorder %s80, %s81
    %p93 = scmp.eq.s32.totalorder %s15, 1
    %p94 = por %p92, %p93
    %p96 = scmp.ne.s32.totalorder %s81, %s95
    %p97 = scmp.eq.s32.totalorder %s15, 0
    %p98 = por %p96, %p97
    %s99 = ssub.s32 %s16, %s28
    %s100 = ssub.s32 %s17, %s24
    %s101 = sor.u32 %s99, %s100
    %p102 = scmp.eq.s32.totalorder %s101, 0
    %s104 = sadd.s32 %s103, 1
    %s105 = scalar_select %p102, %s103, %s104
    %p108 = pneg %p102
    %p109 = scmp.eq.s32.totalorder %s9, 1
    %p110 = por %p108, %p109
    %p111 = scmp.ne.s32.totalorder %s103, %s106
    %p112 = scmp.eq.s32.totalorder %s9, 0
    %p113 = por %p111, %p112
    %p114 = scmp.ne.s32.totalorder %s103, %s106
    %p115 = scmp.eq.s32.totalorder %s14, 1
    %p116 = por %p114, %p115
    %p117 = scmp.ne.s32.totalorder %s106, %s107
    %p118 = scmp.eq.s32.totalorder %s14, 0
    %p119 = por %p117, %p118
    %p120 = scmp.ne.s32.totalorder %s106, %s107
    %p121 = scmp.eq.s32.totalorder %s15, 1
    %p122 = por %p120, %p121
    %p124 = scmp.ne.s32.totalorder %s107, %s123
    %p125 = scmp.eq.s32.totalorder %s15, 0
    %p126 = por %p124, %p125
    %p127 = scmp.le.s32.totalorder 1, %s9
    %p128 = scmp.lt.s32.totalorder %s9, 3
    %p129 = pnand %p127, %p128
    %p130 = pneg %p129
    // Predicated region
    $region9: #{conv2d_block.3} parent=5 // pred_check
      _
    $region10: #{conv2d_block.3} parent=5 // pred_check_branch
      %132 = sbr.rel (%p129) target = $region12
    $region11: #{conv2d_block.3} parent=5 // pred_region
      %s133 = ssub.s32 %s9, 1
      // Predicated region
      $region13: #{conv2d_block.3} parent=11 // pred_check
        %p134 = pneg %p70
      $region14: #{conv2d_block.3} parent=11 // pred_check_branch
        %136 = sbr.rel (%p134) target = $region16
      $region15: #{conv2d_block.3} parent=11 // pred_region
        _
      $region16: #{conv2d_block.3} parent=11 // pred_fallthru
        _
      // Predicated region
      $region17: #{conv2d_block.3} parent=11 // pred_check
        %p137 = pneg %p91
      $region18: #{conv2d_block.3} parent=11 // pred_check_branch
        %139 = sbr.rel (%p137) target = $region20
      $region19: #{conv2d_block.3} parent=11 // pred_region
        _
      $region20: #{conv2d_block.3} parent=11 // pred_fallthru
        _
    $region12: #{conv2d_block.3} parent=5 // pred_fallthru
      _
    %p140 = scmp.lt.s32.totalorder %s9, 2
    // Predicated region
    $region21: #{conv2d_block.3} parent=5 // pred_check
      %p141 = pneg %p140
    $region22: #{conv2d_block.3} parent=5 // pred_check_branch
      %143 = sbr.rel (%p141) target = $region24
    $region23: #{conv2d_block.3} parent=5 // pred_region
      // Predicated region
      $region25: #{conv2d_block.3} parent=23 // pred_check
        %p144 = pneg %p43
      $region26: #{conv2d_block.3} parent=23 // pred_check_branch
        %146 = sbr.rel (%p144) target = $region28
      $region27: #{conv2d_block.3} parent=23 // pred_region
        %p147 = scmp.lt.s32.totalorder %s16, 1
        %s148 = scalar_select %p147, %s16, 1
        %p149 = scmp.lt.s32.totalorder %s17, 0
        %s150 = scalar_select %p149, %s17, 0
        %s151 = sadd.s32 %s150, %s148
        %s152 = smul.addr %s151, 4
        %s153 = scalar_lea.vmem %s0, %s152
      $region28: #{conv2d_block.3} parent=23 // pred_fallthru
        _
    $region24: #{conv2d_block.3} parent=5 // pred_fallthru
      _
    %p154 = scmp.le.s32.totalorder 1, %s9
    %p155 = scmp.lt.s32.totalorder %s9, 3
    %p156 = pnand %p154, %p155
    %p157 = pneg %p156
    // Predicated region
    $region29: #{conv2d_block.3} parent=5 // pred_check
      _
    $region30: #{conv2d_block.3} parent=5 // pred_check_branch
      %159 = sbr.rel (%p156) target = $region32
    $region31: #{conv2d_block.3} parent=5 // pred_region
      %s160 = ssub.s32 %s9, 1
      %p161 = scmp.lt.s32.totalorder %s18, 1
      %s162 = scalar_select %p161, %s18, 1
      %p163 = scmp.lt.s32.totalorder %s19, 0
      %s164 = scalar_select %p163, %s19, 0
      %s165 = sadd.s32 %s164, %s162
      %s166 = smul.addr %s165, 4
      %s167 = scalar_lea.vmem %s0, %s166
      %p168 = pneg %p49
      %p169 = pneg %p46
      %p170 = pneg %p70
      %p171 = pneg %p67
      %p172 = pneg %p91
      %p173 = pneg %p88
      %p174 = pneg %p119
      %p175 = pneg %p116
      %p176 = scmp.lt.s32.totalorder %s18, 1
      %s177 = scalar_select %p176, %s18, 1
      %p178 = scmp.lt.s32.totalorder %s19, 0
      %s179 = scalar_select %p178, %s19, 0
      %s180 = sadd.s32 %s179, %s177
      %s181 = smul.addr %s180, 8
      %s182 = scalar_lea.vmem %s3, %s181
      %p183 = scmp.lt.s32.totalorder %s18, 1
      %s184 = scalar_select %p183, %s18, 1
      %p185 = scmp.lt.s32.totalorder %s19, 0
      %s186 = scalar_select %p185, %s19, 0
      %s187 = sadd.s32 %s186, %s184
      %s188 = smul.addr %s187, 4
      %s189 = scalar_lea.vmem %s0, %s188
      %p190 = scmp.lt.s32.totalorder %s18, 1
      %s191 = scalar_select %p190, %s18, 1
      %p192 = scmp.lt.s32.totalorder %s19, 0
      %s193 = scalar_select %p192, %s19, 0
      %s194 = sadd.s32 %s193, %s191
      %s195 = smul.addr %s194, 8
      %s196 = scalar_lea.vmem %s3, %s195
      %v197 = vld [vmem:[%s189] sm:$0xf]
      %v198 = vunpack.c.l.bf16 %v197
      %v199 = vld [vmem:[%s1] sm:$0xff]
      %201 = vset.pattern.permute.xlu0 0
      %202 = vperm.xlu0 %201, %v199
      %v203 = vpop.permute.xlu0 %202
      %v205 = vmul.f32 %v198, %v203
      %v206 = vld [vmem:[%s2] sm:$0xff]
      %208 = vset.pattern.permute.xlu0 0
      %209 = vperm.xlu0 %208, %v206
      %v210 = vpop.permute.xlu0 %209
      %v212 = vadd.f32 %v205, %v210
      %v213 = vmax.f32 %v212, 0.0
      %vm214 = vcmask 523264
      %215 = vst.msk [vmem:[%s196] sm:$0xff] %vm214, %v213
      %p216 = scmp.lt.s32.totalorder %s18, 1
      %s217 = scalar_select %p216, %s18, 1
      %p218 = scmp.lt.s32.totalorder %s19, 0
      %s219 = scalar_select %p218, %s19, 0
      %s220 = sadd.s32 %s219, %s217
      %s221 = smul.addr %s220, 8
      %s222 = scalar_lea.vmem %s3, %s221
      // Predicated region
      $region33: #{conv2d_block.3} parent=31 // pred_check
        %p223 = pneg %p116
      $region34: #{conv2d_block.3} parent=31 // pred_check_branch
        %225 = sbr.rel (%p223) target = $region36
      $region35: #{conv2d_block.3} parent=31 // pred_region
        _
      $region36: #{conv2d_block.3} parent=31 // pred_fallthru
        _
    $region32: #{conv2d_block.3} parent=5 // pred_fallthru
      _
    %p226 = scmp.le.s32.totalorder 2, %s9
    // Predicated region
    $region37: #{conv2d_block.3} parent=5 // pred_check
      %p227 = pneg %p226
    $region38: #{conv2d_block.3} parent=5 // pred_check_branch
      %229 = sbr.rel (%p227) target = $region40
    $region39: #{conv2d_block.3} parent=5 // pred_region
      %s230 = ssub.s32 %s9, 2
      // Predicated region
      $region41: #{conv2d_block.3} parent=39 // pred_check
        %p231 = pneg %p122
      $region42: #{conv2d_block.3} parent=39 // pred_check_branch
        %233 = sbr.rel (%p231) target = $region44
      $region43: #{conv2d_block.3} parent=39 // pred_region
        %p234 = scmp.lt.s32.totalorder %s20, 1
        %s235 = scalar_select %p234, %s20, 1
        %p236 = scmp.lt.s32.totalorder %s21, 0
        %s237 = scalar_select %p236, %s21, 0
        %s238 = sadd.s32 %s237, %s235
        %s239 = smul.addr %s238, 8
        %s240 = scalar_lea.vmem %s3, %s239
      $region44: #{conv2d_block.3} parent=39 // pred_fallthru
        _
    $region40: #{conv2d_block.3} parent=5 // pred_fallthru
      _
  $region6: #{conv2d_block.3} parent=0 // loop_footer
    %s13 = sadd.s32 1, %s9
  $region7: #{conv2d_block.3} parent=0 // loop_footer_branch
    %8 = sbr.rel target = $region3
  $region8: #{conv2d_block.3} parent=0 // loop_exit
    _

// kernel: conv2d_block.2
$region0: #{conv2d_block.2}
  #allocation0 [shape = 'u32[]', space=smem, size = 0x4, offset = 0x4, fixed_abs, tag = 'smem constant byte address 0x4 - core index']
  #allocation1 [shape = 'u32[144,128]{1,0:T(1,128)}', space=vmem, size = 0x12000, scoped, tag = 'internal scratch']
  %s0 = inlined_call_operand.vmem [shape: bf16[2,36,64], index: 0, kind: input, shape index: {}]
  %s1 = inlined_call_operand.vmem [shape: bf16[8,36], index: 1, kind: input, shape index: {}]
  %s2 = inlined_call_operand.vmem [shape: f32[8,1], index: 2, kind: input, shape index: {}]
  %s3 = inlined_call_operand.vmem [shape: bf16[2,8,64], index: 3, kind: output, shape index: {0}]
  %s4 = inlined_call_operand.vmem [shape: f32[2,1,64], index: 4, kind: output, shape index: {1}]
  %s5 = inlined_call_operand.vmem [shape: f32[2,1,64], index: 5, kind: output, shape index: {2}]
  %s6 = inlined_call_operand.vmem [shape: f32[2,1,8,1], index: 6, kind: output, shape index: {3}]
  %s7 = inlined_call_operand.vmem [shape: f32[2,1,8,1], index: 7, kind: output, shape index: {4}]
  %8 = xla_tuple %s3, %s4, %s5, %s6, %s7
  %s9 = sld [smem:[#allocation0]]
  $region77: #{conv2d_block.2} parent=0
    _
  %s11 = ssub.s32 1, %s9
  %s12 = scalar_select 0, %s11, %s9
  loop: start=0, step=1, limit=4
  $region2: #{conv2d_block.2} parent=0 // loop_pre_header
    _
  $region3: #{conv2d_block.2} parent=0 // loop_header
    %s14 = sphi 0, %s18
    %p15 = scmp.ge.s32.totalorder %s14, 4
    %s21 = sphi 0, %s33
    %s22 = sphi 0, %s29
    %s23 = sphi 0, %s21
    %s24 = sphi 0, %s22
    %s25 = sphi 0, %s23
    %s26 = sphi 0, %s24
    %s38 = sphi 0, %s40
    %s41 = sphi 0, %s38
    %s42 = sphi 0, %s41
    %s58 = sphi 0, %s42
    %s62 = sphi 0, %s62
    %s64 = sphi 0, %s62
    %s65 = sphi 0, %s64
    %s79 = sphi 0, %s65
    %s83 = sphi 0, %s83
    %s85 = sphi 0, %s83
    %s86 = sphi 0, %s85
    %s100 = sphi 0, %s86
    %s108 = sphi 0, %s110
    %s111 = sphi 0, %s108
    %s112 = sphi 0, %s111
    %s128 = sphi 0, %s112
    %s136 = sphi 0, %s138
    %s139 = sphi 0, %s136
    %s140 = sphi 0, %s139
    %s156 = sphi 0, %s140
    %s164 = sphi 0, %s166
    %s167 = sphi 0, %s164
    %s168 = sphi 0, %s167
    %s184 = sphi 0, %s168
    %s192 = sphi 0, %s194
    %s195 = sphi 0, %s192
    %s196 = sphi 0, %s195
    %s212 = sphi 0, %s196
    %s220 = sphi 0, %s222
    %s223 = sphi 0, %s220
    %s224 = sphi 0, %s223
    %s240 = sphi 0, %s224
  $region4: #{conv2d_block.2} parent=0 // loop_header_branch
    %17 = sbr.rel (%p15) target = $region8
  $region5: #{conv2d_block.2} parent=0 // loop_body
    %s19 = ssub.s32 %s14, 1
    %s20 = ssub.s32 %s14, 2
    %s27 = sadd.s32 1, %s22
    %p28 = scmp.ge.s32.totalorder %s27, 1
    %s29 = scalar_select %p28, 0, %s27
    %s30 = sadd.s32 1, %s21
    %s31 = scalar_select %p28, %s30, %s21
    %p32 = scmp.ge.s32.totalorder %s31, 2
    %s33 = scalar_select %p32, 0, %s31
    %s34 = ssub.s32 %s21, %s33
    %s35 = ssub.s32 %s22, %s29
    %s36 = sor.u32 %s34, %s35
    %p37 = scmp.eq.s32.totalorder %s36, 0
    %s39 = sadd.s32 %s38, 1
    %s40 = scalar_select %p37, %s38, %s39
    %p43 = pneg %p37
    %p44 = scmp.eq.s32.totalorder %s14, 1
    %p45 = por %p43, %p44
    %p46 = scmp.ne.s32.totalorder %s38, %s41
    %p47 = scmp.eq.s32.totalorder %s14, 0
    %p48 = por %p46, %p47
    %p49 = scmp.ne.s32.totalorder %s38, %s41
    %p50 = scmp.eq.s32.totalorder %s19, 1
    %p51 = por %p49, %p50
    %p52 = scmp.ne.s32.totalorder %s41, %s42
    %p53 = scmp.eq.s32.totalorder %s19, 0
    %p54 = por %p52, %p53
    %p55 = scmp.ne.s32.totalorder %s41, %s42
    %p56 = scmp.eq.s32.totalorder %s20, 1
    %p57 = por %p55, %p56
    %p59 = scmp.ne.s32.totalorder %s42, %s58
    %p60 = scmp.eq.s32.totalorder %s20, 0
    %p61 = por %p59, %p60
    %s63 = sadd.s32 %s62, 1
    %p66 = scmp.eq.s32.totalorder %s14, 1
    %p67 = scmp.ne.s32.totalorder %s62, %s64
    %p68 = scmp.eq.s32.totalorder %s14, 0
    %p69 = por %p67, %p68
    %p70 = scmp.ne.s32.totalorder %s62, %s64
    %p71 = scmp.eq.s32.totalorder %s19, 1
    %p72 = por %p70, %p71
    %p73 = scmp.ne.s32.totalorder %s64, %s65
    %p74 = scmp.eq.s32.totalorder %s19, 0
    %p75 = por %p73, %p74
    %p76 = scmp.ne.s32.totalorder %s64, %s65
    %p77 = scmp.eq.s32.totalorder %s20, 1
    %p78 = por %p76, %p77
    %p80 = scmp.ne.s32.totalorder %s65, %s79
    %p81 = scmp.eq.s32.totalorder %s20, 0
    %p82 = por %p80, %p81
    %s84 = sadd.s32 %s83, 1
    %p87 = scmp.eq.s32.totalorder %s14, 1
    %p88 = scmp.ne.s32.totalorder %s83, %s85
    %p89 = scmp.eq.s32.totalorder %s14, 0
    %p90 = por %p88, %p89
    %p91 = scmp.ne.s32.totalorder %s83, %s85
    %p92 = scmp.eq.s32.totalorder %s19, 1
    %p93 = por %p91, %p92
    %p94 = scmp.ne.s32.totalorder %s85, %s86
    %p95 = scmp.eq.s32.totalorder %s19, 0
    %p96 = por %p94, %p95
    %p97 = scmp.ne.s32.totalorder %s85, %s86
    %p98 = scmp.eq.s32.totalorder %s20, 1
    %p99 = por %p97, %p98
    %p101 = scmp.ne.s32.totalorder %s86, %s100
    %p102 = scmp.eq.s32.totalorder %s20, 0
    %p103 = por %p101, %p102
    %s104 = ssub.s32 %s21, %s33
    %s105 = ssub.s32 %s22, %s29
    %s106 = sor.u32 %s104, %s105
    %p107 = scmp.eq.s32.totalorder %s106, 0
    %s109 = sadd.s32 %s108, 1
    %s110 = scalar_select %p107, %s108, %s109
    %p113 = pneg %p107
    %p114 = scmp.eq.s32.totalorder %s14, 1
    %p115 = por %p113, %p114
    %p116 = scmp.ne.s32.totalorder %s108, %s111
    %p117 = scmp.eq.s32.totalorder %s14, 0
    %p118 = por %p116, %p117
    %p119 = scmp.ne.s32.totalorder %s108, %s111
    %p120 = scmp.eq.s32.totalorder %s19, 1
    %p121 = por %p119, %p120
    %p122 = scmp.ne.s32.totalorder %s111, %s112
    %p123 = scmp.eq.s32.totalorder %s19, 0
    %p124 = por %p122, %p123
    %p125 = scmp.ne.s32.totalorder %s111, %s112
    %p126 = scmp.eq.s32.totalorder %s20, 1
    %p127 = por %p125, %p126
    %p129 = scmp.ne.s32.totalorder %s112, %s128
    %p130 = scmp.eq.s32.totalorder %s20, 0
    %p131 = por %p129, %p130
    %s132 = ssub.s32 %s21, %s33
    %s133 = ssub.s32 %s22, %s29
    %s134 = sor.u32 %s132, %s133
    %p135 = scmp.eq.s32.totalorder %s134, 0
    %s137 = sadd.s32 %s136, 1
    %s138 = scalar_select %p135, %s136, %s137
    %p141 = pneg %p135
    %p142 = scmp.eq.s32.totalorder %s14, 1
    %p143 = por %p141, %p142
    %p144 = scmp.ne.s32.totalorder %s136, %s139
    %p145 = scmp.eq.s32.totalorder %s14, 0
    %p146 = por %p144, %p145
    %p147 = scmp.ne.s32.totalorder %s136, %s139
    %p148 = scmp.eq.s32.totalorder %s19, 1
    %p149 = por %p147, %p148
    %p150 = scmp.ne.s32.totalorder %s139, %s140
    %p151 = scmp.eq.s32.totalorder %s19, 0
    %p152 = por %p150, %p151
    %p153 = scmp.ne.s32.totalorder %s139, %s140
    %p154 = scmp.eq.s32.totalorder %s20, 1
    %p155 = por %p153, %p154
    %p157 = scmp.ne.s32.totalorder %s140, %s156
    %p158 = scmp.eq.s32.totalorder %s20, 0
    %p159 = por %p157, %p158
    %s160 = ssub.s32 %s21, %s33
    %s161 = ssub.s32 %s22, %s29
    %s162 = sor.u32 %s160, %s161
    %p163 = scmp.eq.s32.totalorder %s162, 0
    %s165 = sadd.s32 %s164, 1
    %s166 = scalar_select %p163, %s164, %s165
    %p169 = pneg %p163
    %p170 = scmp.eq.s32.totalorder %s14, 1
    %p171 = por %p169, %p170
    %p172 = scmp.ne.s32.totalorder %s164, %s167
    %p173 = scmp.eq.s32.totalorder %s14, 0
    %p174 = por %p172, %p173
    %p175 = scmp.ne.s32.totalorder %s164, %s167
    %p176 = scmp.eq.s32.totalorder %s19, 1
    %p177 = por %p175, %p176
    %p178 = scmp.ne.s32.totalorder %s167, %s168
    %p179 = scmp.eq.s32.totalorder %s19, 0
    %p180 = por %p178, %p179
    %p181 = scmp.ne.s32.totalorder %s167, %s168
    %p182 = scmp.eq.s32.totalorder %s20, 1
    %p183 = por %p181, %p182
    %p185 = scmp.ne.s32.totalorder %s168, %s184
    %p186 = scmp.eq.s32.totalorder %s20, 0
    %p187 = por %p185, %p186
    %s188 = ssub.s32 %s21, %s33
    %s189 = ssub.s32 %s22, %s29
    %s190 = sor.u32 %s188, %s189
    %p191 = scmp.eq.s32.totalorder %s190, 0
    %s193 = sadd.s32 %s192, 1
    %s194 = scalar_select %p191, %s192, %s193
    %p197 = pneg %p191
    %p198 = scmp.eq.s32.totalorder %s14, 1
    %p199 = por %p197, %p198
    %p200 = scmp.ne.s32.totalorder %s192, %s195
    %p201 = scmp.eq.s32.totalorder %s14, 0
    %p202 = por %p200, %p201
    %p203 = scmp.ne.s32.totalorder %s192, %s195
    %p204 = scmp.eq.s32.totalorder %s19, 1
    %p205 = por %p203, %p204
    %p206 = scmp.ne.s32.totalorder %s195, %s196
    %p207 = scmp.eq.s32.totalorder %s19, 0
    %p208 = por %p206, %p207
    %p209 = scmp.ne.s32.totalorder %s195, %s196
    %p210 = scmp.eq.s32.totalorder %s20, 1
    %p211 = por %p209, %p210
    %p213 = scmp.ne.s32.totalorder %s196, %s212
    %p214 = scmp.eq.s32.totalorder %s20, 0
    %p215 = por %p213, %p214
    %s216 = ssub.s32 %s21, %s33
    %s217 = ssub.s32 %s22, %s29
    %s218 = sor.u32 %s216, %s217
    %p219 = scmp.eq.s32.totalorder %s218, 0
    %s221 = sadd.s32 %s220, 1
    %s222 = scalar_select %p219, %s220, %s221
    %p225 = pneg %p219
    %p226 = scmp.eq.s32.totalorder %s14, 1
    %p227 = por %p225, %p226
    %p228 = scmp.ne.s32.totalorder %s220, %s223
    %p229 = scmp.eq.s32.totalorder %s14, 0
    %p230 = por %p228, %p229
    %p231 = scmp.ne.s32.totalorder %s220, %s223
    %p232 = scmp.eq.s32.totalorder %s19, 1
    %p233 = por %p231, %p232
    %p234 = scmp.ne.s32.totalorder %s223, %s224
    %p235 = scmp.eq.s32.totalorder %s19, 0
    %p236 = por %p234, %p235
    %p237 = scmp.ne.s32.totalorder %s223, %s224
    %p238 = scmp.eq.s32.totalorder %s20, 1
    %p239 = por %p237, %p238
    %p241 = scmp.ne.s32.totalorder %s224, %s240
    %p242 = scmp.eq.s32.totalorder %s20, 0
    %p243 = por %p241, %p242
    %p244 = scmp.le.s32.totalorder 1, %s14
    %p245 = scmp.lt.s32.totalorder %s14, 3
    %p246 = pnand %p244, %p245
    %p247 = pneg %p246
    // Predicated region
    $region9: #{conv2d_block.2} parent=5 // pred_check
      _
    $region10: #{conv2d_block.2} parent=5 // pred_check_branch
      %249 = sbr.rel (%p246) target = $region12
    $region11: #{conv2d_block.2} parent=5 // pred_region
      %s250 = ssub.s32 %s14, 1
      // Predicated region
      $region13: #{conv2d_block.2} parent=11 // pred_check
        %p251 = pneg %p75
      $region14: #{conv2d_block.2} parent=11 // pred_check_branch
        %253 = sbr.rel (%p251) target = $region16
      $region15: #{conv2d_block.2} parent=11 // pred_region
        _
      $region16: #{conv2d_block.2} parent=11 // pred_fallthru
        _
      // Predicated region
      $region17: #{conv2d_block.2} parent=11 // pred_check
        %p254 = pneg %p96
      $region18: #{conv2d_block.2} parent=11 // pred_check_branch
        %256 = sbr.rel (%p254) target = $region20
      $region19: #{conv2d_block.2} parent=11 // pred_region
        _
      $region20: #{conv2d_block.2} parent=11 // pred_fallthru
        _
    $region12: #{conv2d_block.2} parent=5 // pred_fallthru
      _
    %p257 = scmp.lt.s32.totalorder %s14, 2
    // Predicated region
    $region21: #{conv2d_block.2} parent=5 // pred_check
      %p258 = pneg %p257
    $region22: #{conv2d_block.2} parent=5 // pred_check_branch
      %260 = sbr.rel (%p258) target = $region24
    $region23: #{conv2d_block.2} parent=5 // pred_region
      // Predicated region
      $region25: #{conv2d_block.2} parent=23 // pred_check
        %p261 = pneg %p48
      $region26: #{conv2d_block.2} parent=23 // pred_check_branch
        %263 = sbr.rel (%p261) target = $region28
      $region27: #{conv2d_block.2} parent=23 // pred_region
        %p264 = scmp.lt.s32.totalorder %s21, 1
        %s265 = scalar_select %p264, %s21, 1
        %p266 = scmp.lt.s32.totalorder %s22, 0
        %s267 = scalar_select %p266, %s22, 0
        %s268 = smul.addr %s265, 5
        %s269 = sadd.s32 %s267, %s268
        %s270 = smul.addr %s269, 4
        %s271 = scalar_lea.vmem %s0, %s270
      $region28: #{conv2d_block.2} parent=23 // pred_fallthru
        _
    $region24: #{conv2d_block.2} parent=5 // pred_fallthru
      _
    %p272 = scmp.le.s32.totalorder 1, %s14
    %p273 = scmp.lt.s32.totalorder %s14, 3
    %p274 = pnand %p272, %p273
    %p275 = pneg %p274
    // Predicated region
    $region29: #{conv2d_block.2} parent=5 // pred_check
      _
    $region30: #{conv2d_block.2} parent=5 // pred_check_branch
      %277 = sbr.rel (%p274) target = $region32
    $region31: #{conv2d_block.2} parent=5 // pred_region
      %s278 = ssub.s32 %s14, 1
      %p279 = scmp.lt.s32.totalorder %s23, 1
      %s280 = scalar_select %p279, %s23, 1
      %p281 = scmp.lt.s32.totalorder %s24, 0
      %s282 = scalar_select %p281, %s24, 0
      %s283 = smul.addr %s280, 5
      %s284 = sadd.s32 %s282, %s283
      %s285 = smul.addr %s284, 4
      %s286 = scalar_lea.vmem %s0, %s285
      %p287 = pneg %p54
      %p288 = pneg %p51
      %p289 = pneg %p75
      %p290 = pneg %p72
      %p291 = pneg %p96
      %p292 = pneg %p93
      %p293 = pneg %p124
      %p294 = pneg %p121
      %p295 = scmp.lt.s32.totalorder %s23, 1
      %s296 = scalar_select %p295, %s23, 1
      %p297 = scmp.lt.s32.totalorder %s24, 0
      %s298 = scalar_select %p297, %s24, 0
      %s299 = sadd.s32 %s298, %s296
      %s300 = smul.addr %s299, 4
      %s301 = scalar_lea.vmem %s3, %s300
      %p302 = pneg %p152
      %p303 = pneg %p149
      %p304 = scmp.lt.s32.totalorder %s23, 1
      %s305 = scalar_select %p304, %s23, 1
      %p306 = scmp.lt.s32.totalorder %s24, 0
      %s307 = scalar_select %p306, %s24, 0
      %s308 = sadd.s32 %s307, %s305
      %s309 = scalar_lea.vmem %s4, %s308
      %p310 = pneg %p180
      %p311 = pneg %p177
      %p312 = scmp.lt.s32.totalorder %s23, 1
      %s313 = scalar_select %p312, %s23, 1
      %p314 = scmp.lt.s32.totalorder %s24, 0
      %s315 = scalar_select %p314, %s24, 0
      %s316 = sadd.s32 %s315, %s313
      %s317 = scalar_lea.vmem %s5, %s316
      %p318 = pneg %p208
      %p319 = pneg %p205
      %p320 = scmp.lt.s32.totalorder %s23, 1
      %s321 = scalar_select %p320, %s23, 1
      %p322 = scmp.lt.s32.totalorder %s24, 0
      %s323 = scalar_select %p322, %s24, 0
      %s324 = sadd.s32 %s323, %s321
      %s325 = smul.addr %s324, 8
      %s326 = scalar_lea.vmem %s6, %s325
      %p327 = pneg %p236
      %p328 = pneg %p233
      %p329 = scmp.lt.s32.totalorder %s23, 1
      %s330 = scalar_select %p329, %s23, 1
      %p331 = scmp.lt.s32.totalorder %s24, 0
      %s332 = scalar_select %p331, %s24, 0
      %s333 = sadd.s32 %s332, %s330
      %s334 = smul.addr %s333, 8
      %s335 = scalar_lea.vmem %s7, %s334
      %p336 = scmp.lt.s32.totalorder %s23, 1
      %s337 = scalar_select %p336, %s23, 1
      %p338 = scmp.lt.s32.totalorder %s24, 0
      %s339 = scalar_select %p338, %s24, 0
      %s340 = smul.addr %s337, 5
      %s341 = sadd.s32 %s339, %s340
      %s342 = smul.addr %s341, 4
      %s343 = scalar_lea.vmem %s0, %s342
      %p344 = scmp.lt.s32.totalorder %s23, 1
      %s345 = scalar_select %p344, %s23, 1
      %p346 = scmp.lt.s32.totalorder %s24, 0
      %s347 = scalar_select %p346, %s24, 0
      %s348 = sadd.s32 %s347, %s345
      %s349 = smul.addr %s348, 4
      %s350 = scalar_lea.vmem %s3, %s349
      %p351 = scmp.lt.s32.totalorder %s23, 1
      %s352 = scalar_select %p351, %s23, 1
      %p353 = scmp.lt.s32.totalorder %s24, 0
      %s354 = scalar_select %p353, %s24, 0
      %s355 = sadd.s32 %s354, %s352
      %s356 = scalar_lea.vmem %s4, %s355
      %p357 = scmp.lt.s32.totalorder %s23, 1
      %s358 = scalar_select %p357, %s23, 1
      %p359 = scmp.lt.s32.totalorder %s24, 0
      %s360 = scalar_select %p359, %s24, 0
      %s361 = sadd.s32 %s360, %s358
      %s362 = scalar_lea.vmem %s5, %s361
      %p363 = scmp.lt.s32.totalorder %s23, 1
      %s364 = scalar_select %p363, %s23, 1
      %p365 = scmp.lt.s32.totalorder %s24, 0
      %s366 = scalar_select %p365, %s24, 0
      %s367 = sadd.s32 %s366, %s364
      %s368 = smul.addr %s367, 8
      %s369 = scalar_lea.vmem %s6, %s368
      %p370 = scmp.lt.s32.totalorder %s23, 1
      %s371 = scalar_select %p370, %s23, 1
      %p372 = scmp.lt.s32.totalorder %s24, 0
      %s373 = scalar_select %p372, %s24, 0
      %s374 = sadd.s32 %s373, %s371
      %s375 = smul.addr %s374, 8
      %s376 = scalar_lea.vmem %s7, %s375
      %v378 = vld [vmem:[%s1] sm:$0xf]
      %v379 = vld [vmem:[%s343] sm:$0xf]
      %v380 = vld [vmem:[%s343 + $0x4] sm:$0xf]
      %v381 = vld [vmem:[%s343 + $0x8] sm:$0xf]
      %v382 = vld [vmem:[%s343 + $0xc] sm:$0xf]
      %v383 = vld [vmem:[%s343 + $0x10] sm:$0x3]
      %v384 = vld [vmem:[%s2] sm:$0xff]
      %386 = vset.pattern.permute.xlu0 0
      %387 = vperm.xlu0 %386, %v384
      %v388 = vpop.permute.xlu0 %387
      %v395 = vunpack.c.l.b16 %v379
      %v396 = vunpack.c.l.b16 %v380
      %v397 = vunpack.c.l.b16 %v381
      %v398 = vunpack.c.l.b16 %v382
      %v399 = vunpack.c.l.b16 %v383
      %v400 = vpack.c.b16 %v396, %v395
      %v401 = vpack.c.b16 %v398, %v397
      %v402 = vpack.c.b16 %v399, %v399
      %vm405 = vcmask 293888
      %v407 = vsel %vm405, %v378, 0
      %vm409 = vcmask 1041408
      %v411 = vsel %vm409, %v402, 0
      %413 = vmatprep.subr.bf16.mxu0 0
      %414 = vmatpush1.bf16.msra.mxu0 %v400
      %415 = vmatprep.subr.bf16.mxu0 0
      %416 = vmatpush1.bf16.msra.mxu0 %v401
      %417 = vmatprep.subr.bf16.mxu0 0
      %418 = vmatpush1.bf16.msra.mxu0 %v411
      %419 = vmatprep.subr.bf16.mxu0 0
      %420 = vmatpush1.bf16.msra.mxu0 0
      %421 = vmatprep.subr.bf16.mxu0 0
      %422 = vmatpush1.bf16.msra.mxu0 0
      %423 = vmatprep.subr.bf16.mxu0 0
      %424 = vmatpush1.bf16.msra.mxu0 0
      %425 = vmatprep.subr.bf16.mxu0 0
      %426 = vmatpush1.bf16.msra.mxu0 0
      %427 = vmatprep.subr.bf16.mxu0 0
      %428 = vmatpush1.bf16.msra.mxu0 0
      %429 = vmatprep.subr.bf16.mxu0 0
      %430 = vmatpush1.bf16.msra.mxu0 0
      %431 = vmatprep.subr.bf16.mxu0 0
      %432 = vmatpush1.bf16.msra.mxu0 0
      %433 = vmatprep.subr.bf16.mxu0 0
      %434 = vmatpush1.bf16.msra.mxu0 0
      %435 = vmatprep.subr.bf16.mxu0 0
      %436 = vmatpush1.bf16.msra.mxu0 0
      %437 = vmatprep.subr.bf16.mxu0 0
      %438 = vmatpush1.bf16.msra.mxu0 0
      %439 = vmatprep.subr.bf16.mxu0 0
      %440 = vmatpush1.bf16.msra.mxu0 0
      %441 = vmatprep.subr.bf16.mxu0 0
      %442 = vmatpush1.bf16.msra.mxu0 0
      %443 = vmatprep.subr.bf16.mxu0 0
      %444 = vmatpush1.bf16.msra.mxu0 0
      %445 = vmatprep.mubr.bf16.mxu0 0
      %446 = vmatmul.mubr.bf16.gmra.mrb[0].mxu0 %v407
      %v447 = vpop.f32.mrb[0].mxu0
      %v448 = vadd.f32 %v388, %v447
      %v449 = vpop.f32.mrb[0].mxu0
      %v450 = vpop.f32.mrb[0].mxu0
      %v451 = vpop.f32.mrb[0].mxu0
      %452 = vdwg.mxu0
      %vm453 = vcmask 523264
      %v454 = vsel %vm453, %v448, 0.0
      %v455 = vrot.slane %v454, 4
      %v456 = vadd.f32 %v454, %v455
      %v457 = vrot.slane %v456, 2
      %v458 = vadd.f32 %v456, %v457
      %v459 = vrot.slane %v458, 1
      %v460 = vadd.f32 %v458, %v459
      %v461 = vmul.f32 %v460, 0.125
      %v462 = vsub.f32 %v448, %v461
      %v463 = vmul.f32 %v462, %v462
      %v464 = vsel %vm453, %v463, 0.0
      %v465 = vrot.slane %v464, 4
      %v466 = vadd.f32 %v464, %v465
      %v467 = vrot.slane %v466, 2
      %v468 = vadd.f32 %v466, %v467
      %v469 = vrot.slane %v468, 1
      %v470 = vadd.f32 %v468, %v469
      %v471 = vmul.f32 %v470, 0.14285715
      %v472 = vadd.f32 %v471, 1e-05
      %v473 = vrsqrt.pop %v472
      %v474 = vmul.f32 %v462, %v473
      %vm475 = vcmask 516096
      %476 = vst.msk [vmem:[%s356] sm:$0x1] %vm475, %v461
      %v477 = vrsqrt.pop %v472
      %v478 = vmul.f32 %v472, %v477
      %vm479 = vcmp.eq.f32.partialorder %v472, inf
      %v480 = vsel %vm479, %v472, %v478
      %vm481 = vcmp.eq.f32.partialorder %v472, 0.0
      %v482 = vand.u32 %v472, 2147483648
      %v483 = vsel %vm481, %v482, %v480
      %484 = vst.msk [vmem:[%s362] sm:$0x1] %vm475, %v483
      %v485 = vpack.c.bf16 %v474, %v474
      %vm486 = vcmask 519168
      %487 = vst.msk [vmem:[%s350] sm:$0xf] %vm486, %v485
      %v488 = vsel %vm453, %v474, 0.0
      %489 = vadd.xlane.f32.xlu0 %v488
      %v490 = vpop.xlane.xlu0 %489
      %vm491 = vcmask 7168
      %492 = vst.msk [vmem:[%s369] sm:$0xff] %vm491, %v490
      %v493 = vmul.f32 %v474, %v474
      %v494 = vsel %vm453, %v493, 0.0
      %495 = vadd.xlane.f32.xlu0 %v494
      %v496 = vpop.xlane.xlu0 %495
      %497 = vst.msk [vmem:[%s376] sm:$0xff] %vm491, %v496
      %p498 = scmp.lt.s32.totalorder %s23, 1
      %s499 = scalar_select %p498, %s23, 1
      %p500 = scmp.lt.s32.totalorder %s24, 0
      %s501 = scalar_select %p500, %s24, 0
      %s502 = sadd.s32 %s501, %s499
      %s503 = smul.addr %s502, 4
      %s504 = scalar_lea.vmem %s3, %s503
      %p505 = scmp.lt.s32.totalorder %s23, 1
      %s506 = scalar_select %p505, %s23, 1
      %p507 = scmp.lt.s32.totalorder %s24, 0
      %s508 = scalar_select %p507, %s24, 0
      %s509 = sadd.s32 %s508, %s506
      %s510 = scalar_lea.vmem %s4, %s509
      %p511 = scmp.lt.s32.totalorder %s23, 1
      %s512 = scalar_select %p511, %s23, 1
      %p513 = scmp.lt.s32.totalorder %s24, 0
      %s514 = scalar_select %p513, %s24, 0
      %s515 = sadd.s32 %s514, %s512
      %s516 = scalar_lea.vmem %s5, %s515
      %p517 = scmp.lt.s32.totalorder %s23, 1
      %s518 = scalar_select %p517, %s23, 1
      %p519 = scmp.lt.s32.totalorder %s24, 0
      %s520 = scalar_select %p519, %s24, 0
      %s521 = sadd.s32 %s520, %s518
      %s522 = smul.addr %s521, 8
      %s523 = scalar_lea.vmem %s6, %s522
      %p524 = scmp.lt.s32.totalorder %s23, 1
      %s525 = scalar_select %p524, %s23, 1
      %p526 = scmp.lt.s32.totalorder %s24, 0
      %s527 = scalar_select %p526, %s24, 0
      %s528 = sadd.s32 %s527, %s525
      %s529 = smul.addr %s528, 8
      %s530 = scalar_lea.vmem %s7, %s529
      // Predicated region
      $region33: #{conv2d_block.2} parent=31 // pred_check
        %p531 = pneg %p121
      $region34: #{conv2d_block.2} parent=31 // pred_check_branch
        %533 = sbr.rel (%p531) target = $region36
      $region35: #{conv2d_block.2} parent=31 // pred_region
        _
      $region36: #{conv2d_block.2} parent=31 // pred_fallthru
        _
      // Predicated region
      $region37: #{conv2d_block.2} parent=31 // pred_check
        %p534 = pneg %p149
      $region38: #{conv2d_block.2} parent=31 // pred_check_branch
        %536 = sbr.rel (%p534) target = $region40
      $region39: #{conv2d_block.2} parent=31 // pred_region
        _
      $region40: #{conv2d_block.2} parent=31 // pred_fallthru
        _
      // Predicated region
      $region41: #{conv2d_block.2} parent=31 // pred_check
        %p537 = pneg %p177
      $region42: #{conv2d_block.2} parent=31 // pred_check_branch
        %539 = sbr.rel (%p537) target = $region44
      $region43: #{conv2d_block.2} parent=31 // pred_region
        _
      $region44: #{conv2d_block.2} parent=31 // pred_fallthru
        _
      // Predicated region
      $region45: #{conv2d_block.2} parent=31 // pred_check
        %p540 = pneg %p205
      $region46: #{conv2d_block.2} parent=31 // pred_check_branch
        %542 = sbr.rel (%p540) target = $region48
      $region47: #{conv2d_block.2} parent=31 // pred_region
        _
      $region48: #{conv2d_block.2} parent=31 // pred_fallthru
        _
      // Predicated region
      $region49: #{conv2d_block.2} parent=31 // pred_check
        %p543 = pneg %p233
      $region50: #{conv2d_block.2} parent=31 // pred_check_branch
        %545 = sbr.rel (%p543) target = $region52
      $region51: #{conv2d_block.2} parent=31 // pred_region
        _
      $region52: #{conv2d_block.2} parent=31 // pred_fallthru
        _
    $region32: #{conv2d_block.2} parent=5 // pred_fallthru
      _
    %p546 = scmp.le.s32.totalorder 2, %s14
    // Predicated region
    $region53: #{conv2d_block.2} parent=5 // pred_check
      %p547 = pneg %p546
    $region54: #{conv2d_block.2} parent=5 // pred_check_branch
      %549 = sbr.rel (%p547) target = $region56
    $region55: #{conv2d_block.2} parent=5 // pred_region
      %s550 = ssub.s32 %s14, 2
      // Predicated region
      $region57: #{conv2d_block.2} parent=55 // pred_check
        %p551 = pneg %p127
      $region58: #{conv2d_block.2} parent=55 // pred_check_branch
        %553 = sbr.rel (%p551) target = $region60
      $region59: #{conv2d_block.2} parent=55 // pred_region
        %p554 = scmp.lt.s32.totalorder %s25, 1
        %s555 = scalar_select %p554, %s25, 1
        %p556 = scmp.lt.s32.totalorder %s26, 0
        %s557 = scalar_select %p556, %s26, 0
        %s558 = sadd.s32 %s557, %s555
        %s559 = smul.addr %s558, 4
        %s560 = scalar_lea.vmem %s3, %s559
      $region60: #{conv2d_block.2} parent=55 // pred_fallthru
        _
      // Predicated region
      $region61: #{conv2d_block.2} parent=55 // pred_check
        %p561 = pneg %p155
      $region62: #{conv2d_block.2} parent=55 // pred_check_branch
        %563 = sbr.rel (%p561) target = $region64
      $region63: #{conv2d_block.2} parent=55 // pred_region
        %p564 = scmp.lt.s32.totalorder %s25, 1
        %s565 = scalar_select %p564, %s25, 1
        %p566 = scmp.lt.s32.totalorder %s26, 0
        %s567 = scalar_select %p566, %s26, 0
        %s568 = sadd.s32 %s567, %s565
        %s569 = scalar_lea.vmem %s4, %s568
      $region64: #{conv2d_block.2} parent=55 // pred_fallthru
        _
      // Predicated region
      $region65: #{conv2d_block.2} parent=55 // pred_check
        %p570 = pneg %p183
      $region66: #{conv2d_block.2} parent=55 // pred_check_branch
        %572 = sbr.rel (%p570) target = $region68
      $region67: #{conv2d_block.2} parent=55 // pred_region
        %p573 = scmp.lt.s32.totalorder %s25, 1
        %s574 = scalar_select %p573, %s25, 1
        %p575 = scmp.lt.s32.totalorder %s26, 0
        %s576 = scalar_select %p575, %s26, 0
        %s577 = sadd.s32 %s576, %s574
        %s578 = scalar_lea.vmem %s5, %s577
      $region68: #{conv2d_block.2} parent=55 // pred_fallthru
        _
      // Predicated region
      $region69: #{conv2d_block.2} parent=55 // pred_check
        %p579 = pneg %p211
      $region70: #{conv2d_block.2} parent=55 // pred_check_branch
        %581 = sbr.rel (%p579) target = $region72
      $region71: #{conv2d_block.2} parent=55 // pred_region
        %p582 = scmp.lt.s32.totalorder %s25, 1
        %s583 = scalar_select %p582, %s25, 1
        %p584 = scmp.lt.s32.totalorder %s26, 0
        %s585 = scalar_select %p584, %s26, 0
        %s586 = sadd.s32 %s585, %s583
        %s587 = smul.addr %s586, 8
        %s588 = scalar_lea.vmem %s6, %s587
      $region72: #{conv2d_block.2} parent=55 // pred_fallthru
        _
      // Predicated region
      $region73: #{conv2d_block.2} parent=55 // pred_check
        %p589 = pneg %p239
      $region74: #{conv2d_block.2} parent=55 // pred_check_branch
        %591 = sbr.rel (%p589) target = $region76
      $region75: #{conv2d_block.2} parent=55 // pred_region
        %p592 = scmp.lt.s32.totalorder %s25, 1
        %s593 = scalar_select %p592, %s25, 1
        %p594 = scmp.lt.s32.totalorder %s26, 0
        %s595 = scalar_select %p594, %s26, 0
        %s596 = sadd.s32 %s595, %s593
        %s597 = smul.addr %s596, 8
        %s598 = scalar_lea.vmem %s7, %s597
      $region76: #{conv2d_block.2} parent=55 // pred_fallthru
        _
    $region56: #{conv2d_block.2} parent=5 // pred_fallthru
      _
  $region6: #{conv2d_block.2} parent=0 // loop_footer
    %s18 = sadd.s32 1, %s14
  $region7: #{conv2d_block.2} parent=0 // loop_footer_branch
    %13 = sbr.rel target = $region3
  $region8: #{conv2d_block.2} parent=0 // loop_exit
    _

</llo_original>
